<compile_context>
chip_gen: v7x
topology: tpu7x:2x2x1
jax: 0.10.0
libtpu: 0.0.40
codegen_flags: <defaults>
</compile_context>

<pallas_src>
import functools

import jax
import jax.numpy as jnp
from jax import lax
from jax.experimental import pallas as pl
from jax.experimental.pallas import tpu as pltpu

AVERAGING_CONSTANT = 0.01             # MovingAveragePerChannelMinMaxObserver default
QUANT_RANGE = 255.0                   # observer dtype quint8 -> quant_max - quant_min
QINT8_MIN, QINT8_MAX = -128.0, 127.0  # quantize_per_channel(dtype=qint8) clamp range
EPS = float(jnp.finfo(jnp.float32).eps)

# Tap order (dy, dx); tap t uses kernel weight w[:, :, dy+1, dx+1].
_OFFSETS = tuple((dy, dx) for dy in (-1, 0, 1) for dx in (-1, 0, 1))


# ----------------------------------------------------------------- kernel ---

def _fused_forward_kernel(x_ref, mask_ref, w_ref, o_ref, *, H, W, CP, OC3, BT):
    """BT batch elements: conv -> observe/fq -> conv -> observe/fq -> conv."""
    HW = H * W
    KP = 9 * CP + 8                                      # stacked contraction dim
    BIAS_ROWS = KP - 9 * CP

    mask = mask_ref[...]                                 # (KP, HW) f32, grid-invariant
    ones_blk = jnp.ones((BIAS_ROWS, HW), jnp.float32)    # bias rows (hoisted, reused)
    w1 = w_ref[0].astype(jnp.bfloat16)                   # (8, KP)
    w2 = w_ref[1].astype(jnp.bfloat16)                   # (8, KP)
    w3 = w_ref[2][:OC3].astype(jnp.bfloat16)             # (OC3, KP)

    def conv3x3(a, w):
        # a: (CP, H*W) f32.  Build the stacked-tap operand (9 shifted copies +
        # ones rows), zero the wrapped boundary positions with ONE multiply,
        # cast to bf16, and run a single MXU dot with the bias folded in.
        parts = []
        for dy, dx in _OFFSETS:
            off = dy * W + dx                            # stacked[:, p] = a[:, p+off]
            parts.append(a if off == 0 else pltpu.roll(a, (-off) % HW, 1))
        parts.append(ones_blk)
        stk = jnp.concatenate(parts, axis=0)             # (KP, HW) f32
        stk = (stk * mask).astype(jnp.bfloat16)          # single fused edge mask
        return jnp.dot(w, stk, preferred_element_type=jnp.float32)  # (OC, HW) f32

    def channel_minmax(a):
        mn = jnp.min(jnp.min(a, axis=1, keepdims=True), axis=0, keepdims=True)
        mx = jnp.max(jnp.max(a, axis=1, keepdims=True), axis=0, keepdims=True)
        return mn, mx                                    # (1, 1) each (this sample)

    def calc_scale(mn, mx):
        # MinMaxObserver.calculate_qparams (per_channel_affine, quint8 range);
        # zero_point is zeroed by the module so only scale matters.
        s = (jnp.maximum(mx, 0.0) - jnp.minimum(mn, 0.0)) * (1.0 / QUANT_RANGE)
        return jnp.maximum(s, EPS)

    def fake_quant(a, s):
        # quantize_per_channel(axis=0, qint8, zp=0) followed by dequantize.
        inv = pl.reciprocal(s, approx=True)              # (1,1) divide -> EUP slot
        q = jnp.clip(jnp.round(a * inv), QINT8_MIN, QINT8_MAX)
        return q * s

    # BT is tiny and static (1 for batch <= 2), so a plain unrolled loop is fine.
    for s in range(BT):
        x0 = x_ref[s]                                    # (CP, HW)

        # ---- stage 0: model_list[0] + observer init + fake-quant ----
        a1 = conv3x3(x0, w1)
        mn, mx = channel_minmax(a1)                      # observer first call
        sc = calc_scale(mn, mx)
        a1 = fake_quant(a1, sc)

        # ---- stage 1: model_list[1] + observer moving-average + fake-quant ----
        a2 = conv3x3(a1, w2)
        mn2, mx2 = channel_minmax(a2)
        mn = mn + AVERAGING_CONSTANT * (mn2 - mn)
        mx = mx + AVERAGING_CONSTANT * (mx2 - mx)
        sc = calc_scale(mn, mx)
        a2 = fake_quant(a2, sc)

        # ---- stage 2: model_list[2] ----
        o_ref[s] = conv3x3(a2, w3)                       # lane-dense (OC3, HW) store


# ---------------------------------------------------------------- wrapper ---

def _edge_masks(H, W):
    """(9, H*W) f32 masks: 1.0 where the (dy,dx) neighbour is inside the image."""
    ys = jnp.arange(H, dtype=jnp.int32).reshape(H, 1)
    xs = jnp.arange(W, dtype=jnp.int32).reshape(1, W)
    rows = []
    for dy, dx in _OFFSETS:
        valid = ((ys + dy >= 0) & (ys + dy < H) &
                 (xs + dx >= 0) & (xs + dx < W))
        rows.append(valid.reshape(H * W))
    return jnp.stack(rows, axis=0).astype(jnp.float32)


def _fuse_layer(w, b, cp, kp, ocp):
    """(OC, Cin, 3, 3) + (OC,) -> (ocp, kp) fused weight with bias column."""
    oc, cin = w.shape[0], w.shape[1]
    wf = jnp.zeros((ocp, kp), jnp.float32)
    for t, (dy, dx) in enumerate(_OFFSETS):
        wf = wf.at[:oc, t * cp:t * cp + cin].set(w[:, :, dy + 1, dx + 1])
    wf = wf.at[:oc, 9 * cp].set(b)        # bias column, hits the ones rows
    return wf


@jax.jit
def quantiseze_forward(x, params):
    # TODO(synk): the PyTorch observer buffers persist across forward() calls;
    # here the min/max state is threaded only within this single forward.
    (w1, b1), (w2, b2), (w3, b3) = params
    n, c0, h, w = x.shape
    hw = h * w
    oc3 = w3.shape[0]

    cp = 8                                # sublane-padded channel count per tap
    assert max(c0, w1.shape[0], w2.shape[0], w3.shape[0]) <= cp
    kp = 9 * cp + 8                       # 9 taps * 8 channels + 8 bias rows = 80
    ocp = cp

    # Batch blocking: at most 2 grid steps.  Exactly 2 "parallel" steps for
    # batch >= 2 keeps both v7x TensorCores busy; the one extra step on
    # single-TC v5e/v6e costs only ~0.35 us.
    bt = n // 2 if (n >= 2 and n % 2 == 0) else 1
    n_steps = n // bt

    x_flat = x.reshape(n, c0, hw).astype(jnp.float32)    # NCHW, spatial flattened
    if c0 < cp:
        x_flat = jnp.concatenate(
            [x_flat, jnp.zeros((n, cp - c0, hw), jnp.float32)], axis=1)

    m9 = _edge_masks(h, w)                               # (9, HW)
    mask = jnp.concatenate(
        [jnp.repeat(m9, cp, axis=0),                     # tap row repeated per channel
         jnp.ones((kp - 9 * cp, hw), jnp.float32)],      # ones for the bias rows
        axis=0)                                          # (kp, HW)

    wfused = jnp.stack([_fuse_layer(w1, b1, cp, kp, ocp),
                        _fuse_layer(w2, b2, cp, kp, ocp),
                        _fuse_layer(w3, b3, cp, kp, ocp)], axis=0)  # (3, 8, kp)

    kernel = functools.partial(_fused_forward_kernel,
                               H=h, W=w, CP=cp, OC3=oc3, BT=bt)

    out = pl.pallas_call(
        kernel,
        out_shape=jax.ShapeDtypeStruct((n, oc3, hw), jnp.float32),
        grid=(n_steps,),
        in_specs=[
            pl.BlockSpec((bt, cp, hw), lambda i: (i, 0, 0)),   # bt samples per step
            pl.BlockSpec((kp, hw), lambda i: (0, 0)),          # tiled edge masks
            pl.BlockSpec((3, ocp, kp), lambda i: (0, 0, 0)),   # fused weights+bias
        ],
        out_specs=pl.BlockSpec((bt, oc3, hw), lambda i: (i, 0, 0)),
        compiler_params=pltpu.CompilerParams(
            dimension_semantics=("parallel",)),
    )(x_flat, mask, wfused)

    return out.reshape(n, oc3, h, w)      # back to NCHW (free reshape, no transpose)


# ------------------------------------------------------- pure-JAX reference ---

def _reference_forward(x, params):
    (w1, b1), (w2, b2), (w3, b3) = params

    def conv(x, w, b):
        y = lax.conv_general_dilated(
            x, w, window_strides=(1, 1), padding=((1, 1), (1, 1)),
            dimension_numbers=("NCHW", "OIHW", "NCHW"))
        return y + b[None, :, None, None]

    def minmax(y):
        return jnp.min(y, axis=(1, 2, 3)), jnp.max(y, axis=(1, 2, 3))

    def calc_scale(mn, mx):
        s = (jnp.maximum(mx, 0.0) - jnp.minimum(mn, 0.0)) / QUANT_RANGE
        return jnp.maximum(s, EPS)

    def fq(y, s):
        s4 = s[:, None, None, None]
        q = jnp.clip(jnp.round(y / s4), QINT8_MIN, QINT8_MAX)
        return q * s4

    y = conv(x, w1, b1)
    mn, mx = minmax(y)
    y = conv(fq(y, calc_scale(mn, mx)), w2, b2)
    mn2, mx2 = minmax(y)
    mn = mn + AVERAGING_CONSTANT * (mn2 - mn)
    mx = mx + AVERAGING_CONSTANT * (mx2 - mx)
    y = conv(fq(y, calc_scale(mn, mx)), w3, b3)
    return y


if __name__ == "__main__":
    key = jax.random.PRNGKey(0)
    kx, k1, k2, k3, kb1, kb2, kb3 = jax.random.split(key, 7)

    N, C, H, W = 2, 4, 16, 16
    C1, C2, C3 = 8, 8, 4

    x = jax.random.normal(kx, (N, C, H, W), jnp.float32)
    w1 = 0.1 * jax.random.normal(k1, (C1, C, 3, 3), jnp.float32)
    b1 = 0.1 * jax.random.normal(kb1, (C1,), jnp.float32)
    w2 = 0.1 * jax.random.normal(k2, (C2, C1, 3, 3), jnp.float32)
    b2 = 0.1 * jax.random.normal(kb2, (C2,), jnp.float32)
    w3 = 0.1 * jax.random.normal(k3, (C3, C2, 3, 3), jnp.float32)
    b3 = 0.1 * jax.random.normal(kb3, (C3,), jnp.float32)
    params = ((w1, b1), (w2, b2), (w3, b3))

    out = quantiseze_forward(x, params)
    jax.block_until_ready(out)
    assert out.shape == (N, C3, H, W)

    ref = _reference_forward(x, params)
    err = float(jnp.max(jnp.abs(out - ref)))
    # bf16 MXU operands / approx reciprocal can flip a few fake-quant rounding
    # boundaries by ~one quantization step (<0.05 here); a structural bug
    # (wrong tap/shift pairing, bad mask) produces O(1) errors.
    assert err < 0.2, f"max abs err vs reference: {err}"

    print("KERNEL_OK")
</pallas_src>

<mosaic_0001>
module attributes {stable_mosaic.version = 11 : i64} {
  func.func @_fused_forward_kernel(%arg0: i32, %arg1: memref<1x8x256xf32, #tpu.memory_space<vmem>>, %arg2: memref<80x256xf32, #tpu.memory_space<vmem>>, %arg3: memref<3x8x80xf32, #tpu.memory_space<vmem>>, %arg4: memref<1x4x256xf32, #tpu.memory_space<vmem>>) attributes {dimension_semantics = [#tpu.dimension_semantics<parallel>], iteration_bounds = array<i64: 2>, scalar_prefetch = 0 : i64, scratch_operands = 0 : i64, tpu.core_type = #tpu.core_type<tc>, window_params = [{transform_indices = @transform_0, window_bounds = array<i64: 1, 8, 256>}, {pipeline_mode = #tpu.pipeline_mode<synchronous>, transform_indices = @transform_1, window_bounds = array<i64: 80, 256>}, {pipeline_mode = #tpu.pipeline_mode<synchronous>, transform_indices = @transform_2, window_bounds = array<i64: 3, 8, 80>}, {transform_indices = @transform_3, window_bounds = array<i64: 1, 4, 256>}]} {
    %c0 = arith.constant 0 : index
    %c0_0 = arith.constant 0 : index
    %0 = vector.load %arg2[%c0, %c0_0] : memref<80x256xf32, #tpu.memory_space<vmem>>, vector<80x256xf32>
    %cst = arith.constant 1.000000e+00 : f32
    %1 = vector.broadcast %cst : f32 to vector<8x256xf32>
    %c0_1 = arith.constant 0 : index
    %c0_2 = arith.constant 0 : index
    %c0_3 = arith.constant 0 : index
    %2 = vector.load %arg3[%c0_1, %c0_2, %c0_3] : memref<3x8x80xf32, #tpu.memory_space<vmem>>, vector<1x8x80xf32>
    %3 = vector.shape_cast %2 : vector<1x8x80xf32> to vector<8x80xf32>
    %4 = arith.truncf %3 : vector<8x80xf32> to vector<8x80xbf16>
    %c1 = arith.constant 1 : index
    %c0_4 = arith.constant 0 : index
    %c0_5 = arith.constant 0 : index
    %5 = vector.load %arg3[%c1, %c0_4, %c0_5] : memref<3x8x80xf32, #tpu.memory_space<vmem>>, vector<1x8x80xf32>
    %6 = vector.shape_cast %5 : vector<1x8x80xf32> to vector<8x80xf32>
    %7 = arith.truncf %6 : vector<8x80xf32> to vector<8x80xbf16>
    %c2 = arith.constant 2 : index
    %c0_6 = arith.constant 0 : index
    %c0_7 = arith.constant 0 : index
    %8 = vector.load %arg3[%c2, %c0_6, %c0_7] : memref<3x8x80xf32, #tpu.memory_space<vmem>>, vector<1x8x80xf32>
    %9 = vector.shape_cast %8 : vector<1x8x80xf32> to vector<8x80xf32>
    %10 = vector.extract_strided_slice %9 {offsets = [0, 0], sizes = [4, 80], strides = [1, 1]} : vector<8x80xf32> to vector<4x80xf32>
    %11 = arith.truncf %10 : vector<4x80xf32> to vector<4x80xbf16>
    %c0_8 = arith.constant 0 : index
    %c0_9 = arith.constant 0 : index
    %c0_10 = arith.constant 0 : index
    %12 = vector.load %arg1[%c0_8, %c0_9, %c0_10] : memref<1x8x256xf32, #tpu.memory_space<vmem>>, vector<1x8x256xf32>
    %13 = vector.shape_cast %12 : vector<1x8x256xf32> to vector<8x256xf32>
    %c17_i32 = arith.constant 17 : i32
    %14 = tpu.dynamic_rotate %13 by %c17_i32 dim 1 : vector<8x256xf32>, i32 -> vector<8x256xf32>
    %c16_i32 = arith.constant 16 : i32
    %15 = tpu.dynamic_rotate %13 by %c16_i32 dim 1 : vector<8x256xf32>, i32 -> vector<8x256xf32>
    %c15_i32 = arith.constant 15 : i32
    %16 = tpu.dynamic_rotate %13 by %c15_i32 dim 1 : vector<8x256xf32>, i32 -> vector<8x256xf32>
    %c1_i32 = arith.constant 1 : i32
    %17 = tpu.dynamic_rotate %13 by %c1_i32 dim 1 : vector<8x256xf32>, i32 -> vector<8x256xf32>
    %c255_i32 = arith.constant 255 : i32
    %18 = tpu.dynamic_rotate %13 by %c255_i32 dim 1 : vector<8x256xf32>, i32 -> vector<8x256xf32>
    %c241_i32 = arith.constant 241 : i32
    %19 = tpu.dynamic_rotate %13 by %c241_i32 dim 1 : vector<8x256xf32>, i32 -> vector<8x256xf32>
    %c240_i32 = arith.constant 240 : i32
    %20 = tpu.dynamic_rotate %13 by %c240_i32 dim 1 : vector<8x256xf32>, i32 -> vector<8x256xf32>
    %c239_i32 = arith.constant 239 : i32
    %21 = tpu.dynamic_rotate %13 by %c239_i32 dim 1 : vector<8x256xf32>, i32 -> vector<8x256xf32>
    %22 = tpu.concatenate %14, %15, %16, %17, %13, %18, %19, %20, %21, %1 in 0 : vector<8x256xf32>, vector<8x256xf32>, vector<8x256xf32>, vector<8x256xf32>, vector<8x256xf32>, vector<8x256xf32>, vector<8x256xf32>, vector<8x256xf32>, vector<8x256xf32>, vector<8x256xf32> -> vector<80x256xf32>
    %23 = arith.mulf %22, %0 : vector<80x256xf32>
    %24 = arith.truncf %23 : vector<80x256xf32> to vector<80x256xbf16>
    %cst_11 = arith.constant dense<0.000000e+00> : vector<8x256xf32>
    %25 = tpu.matmul %4, %24, %cst_11 {dimension_numbers = #tpu.dot_dimension_numbers<[1], [0], [0], [1], [0, 0, 1, 1], [], []>} : vector<8x80xbf16>, vector<80x256xbf16>, vector<8x256xf32> -> vector<8x256xf32>
    %cst_12 = arith.constant dense<0x7F800000> : vector<8xf32>
    %26 = vector.multi_reduction <minimumf>, %25, %cst_12 [1] : vector<8x256xf32> to vector<8xf32>
    %27 = vector.shape_cast %26 : vector<8xf32> to vector<8x1xf32>
    %cst_13 = arith.constant dense<0x7F800000> : vector<1xf32>
    %28 = vector.multi_reduction <minimumf>, %27, %cst_13 [0] : vector<8x1xf32> to vector<1xf32>
    %29 = vector.shape_cast %28 : vector<1xf32> to vector<1x1xf32>
    %cst_14 = arith.constant dense<0xFF800000> : vector<8xf32>
    %30 = vector.multi_reduction <maximumf>, %25, %cst_14 [1] : vector<8x256xf32> to vector<8xf32>
    %31 = vector.shape_cast %30 : vector<8xf32> to vector<8x1xf32>
    %cst_15 = arith.constant dense<0xFF800000> : vector<1xf32>
    %32 = vector.multi_reduction <maximumf>, %31, %cst_15 [0] : vector<8x1xf32> to vector<1xf32>
    %33 = vector.shape_cast %32 : vector<1xf32> to vector<1x1xf32>
    %cst_16 = arith.constant 0.000000e+00 : f32
    %34 = vector.broadcast %cst_16 : f32 to vector<1x1xf32>
    %35 = arith.maximumf %33, %34 : vector<1x1xf32>
    %cst_17 = arith.constant 0.000000e+00 : f32
    %36 = vector.broadcast %cst_17 : f32 to vector<1x1xf32>
    %37 = arith.minimumf %29, %36 : vector<1x1xf32>
    %38 = arith.subf %35, %37 : vector<1x1xf32>
    %cst_18 = arith.constant 0.00392156886 : f32
    %39 = vector.broadcast %cst_18 : f32 to vector<1x1xf32>
    %40 = arith.mulf %38, %39 : vector<1x1xf32>
    %cst_19 = arith.constant 1.1920929E-7 : f32
    %41 = vector.broadcast %cst_19 : f32 to vector<1x1xf32>
    %42 = arith.maximumf %40, %41 : vector<1x1xf32>
    %43 = tpu.reciprocal %42 {approx = true} : vector<1x1xf32> -> vector<1x1xf32>
    %44 = vector.broadcast %43 : vector<1x1xf32> to vector<8x256xf32>
    %45 = arith.mulf %25, %44 : vector<8x256xf32>
    %46 = math.roundeven %45 : vector<8x256xf32>
    %cst_20 = arith.constant -1.280000e+02 : f32
    %cst_21 = arith.constant 1.270000e+02 : f32
    %47 = vector.broadcast %cst_20 : f32 to vector<8x256xf32>
    %48 = arith.maximumf %47, %46 : vector<8x256xf32>
    %49 = vector.broadcast %cst_21 : f32 to vector<8x256xf32>
    %50 = arith.minimumf %49, %48 : vector<8x256xf32>
    %51 = vector.broadcast %42 : vector<1x1xf32> to vector<8x256xf32>
    %52 = arith.mulf %50, %51 : vector<8x256xf32>
    %c17_i32_22 = arith.constant 17 : i32
    %53 = tpu.dynamic_rotate %52 by %c17_i32_22 dim 1 : vector<8x256xf32>, i32 -> vector<8x256xf32>
    %c16_i32_23 = arith.constant 16 : i32
    %54 = tpu.dynamic_rotate %52 by %c16_i32_23 dim 1 : vector<8x256xf32>, i32 -> vector<8x256xf32>
    %c15_i32_24 = arith.constant 15 : i32
    %55 = tpu.dynamic_rotate %52 by %c15_i32_24 dim 1 : vector<8x256xf32>, i32 -> vector<8x256xf32>
    %c1_i32_25 = arith.constant 1 : i32
    %56 = tpu.dynamic_rotate %52 by %c1_i32_25 dim 1 : vector<8x256xf32>, i32 -> vector<8x256xf32>
    %c255_i32_26 = arith.constant 255 : i32
    %57 = tpu.dynamic_rotate %52 by %c255_i32_26 dim 1 : vector<8x256xf32>, i32 -> vector<8x256xf32>
    %c241_i32_27 = arith.constant 241 : i32
    %58 = tpu.dynamic_rotate %52 by %c241_i32_27 dim 1 : vector<8x256xf32>, i32 -> vector<8x256xf32>
    %c240_i32_28 = arith.constant 240 : i32
    %59 = tpu.dynamic_rotate %52 by %c240_i32_28 dim 1 : vector<8x256xf32>, i32 -> vector<8x256xf32>
    %c239_i32_29 = arith.constant 239 : i32
    %60 = tpu.dynamic_rotate %52 by %c239_i32_29 dim 1 : vector<8x256xf32>, i32 -> vector<8x256xf32>
    %61 = tpu.concatenate %53, %54, %55, %56, %52, %57, %58, %59, %60, %1 in 0 : vector<8x256xf32>, vector<8x256xf32>, vector<8x256xf32>, vector<8x256xf32>, vector<8x256xf32>, vector<8x256xf32>, vector<8x256xf32>, vector<8x256xf32>, vector<8x256xf32>, vector<8x256xf32> -> vector<80x256xf32>
    %62 = arith.mulf %61, %0 : vector<80x256xf32>
    %63 = arith.truncf %62 : vector<80x256xf32> to vector<80x256xbf16>
    %cst_30 = arith.constant dense<0.000000e+00> : vector<8x256xf32>
    %64 = tpu.matmul %7, %63, %cst_30 {dimension_numbers = #tpu.dot_dimension_numbers<[1], [0], [0], [1], [0, 0, 1, 1], [], []>} : vector<8x80xbf16>, vector<80x256xbf16>, vector<8x256xf32> -> vector<8x256xf32>
    %cst_31 = arith.constant dense<0x7F800000> : vector<8xf32>
    %65 = vector.multi_reduction <minimumf>, %64, %cst_31 [1] : vector<8x256xf32> to vector<8xf32>
    %66 = vector.shape_cast %65 : vector<8xf32> to vector<8x1xf32>
    %cst_32 = arith.constant dense<0x7F800000> : vector<1xf32>
    %67 = vector.multi_reduction <minimumf>, %66, %cst_32 [0] : vector<8x1xf32> to vector<1xf32>
    %68 = vector.shape_cast %67 : vector<1xf32> to vector<1x1xf32>
    %cst_33 = arith.constant dense<0xFF800000> : vector<8xf32>
    %69 = vector.multi_reduction <maximumf>, %64, %cst_33 [1] : vector<8x256xf32> to vector<8xf32>
    %70 = vector.shape_cast %69 : vector<8xf32> to vector<8x1xf32>
    %cst_34 = arith.constant dense<0xFF800000> : vector<1xf32>
    %71 = vector.multi_reduction <maximumf>, %70, %cst_34 [0] : vector<8x1xf32> to vector<1xf32>
    %72 = vector.shape_cast %71 : vector<1xf32> to vector<1x1xf32>
    %73 = arith.subf %68, %29 : vector<1x1xf32>
    %cst_35 = arith.constant 0.00999999977 : f32
    %74 = vector.broadcast %cst_35 : f32 to vector<1x1xf32>
    %75 = arith.mulf %74, %73 : vector<1x1xf32>
    %76 = arith.addf %29, %75 : vector<1x1xf32>
    %77 = arith.subf %72, %33 : vector<1x1xf32>
    %cst_36 = arith.constant 0.00999999977 : f32
    %78 = vector.broadcast %cst_36 : f32 to vector<1x1xf32>
    %79 = arith.mulf %78, %77 : vector<1x1xf32>
    %80 = arith.addf %33, %79 : vector<1x1xf32>
    %cst_37 = arith.constant 0.000000e+00 : f32
    %81 = vector.broadcast %cst_37 : f32 to vector<1x1xf32>
    %82 = arith.maximumf %80, %81 : vector<1x1xf32>
    %cst_38 = arith.constant 0.000000e+00 : f32
    %83 = vector.broadcast %cst_38 : f32 to vector<1x1xf32>
    %84 = arith.minimumf %76, %83 : vector<1x1xf32>
    %85 = arith.subf %82, %84 : vector<1x1xf32>
    %cst_39 = arith.constant 0.00392156886 : f32
    %86 = vector.broadcast %cst_39 : f32 to vector<1x1xf32>
    %87 = arith.mulf %85, %86 : vector<1x1xf32>
    %cst_40 = arith.constant 1.1920929E-7 : f32
    %88 = vector.broadcast %cst_40 : f32 to vector<1x1xf32>
    %89 = arith.maximumf %87, %88 : vector<1x1xf32>
    %90 = tpu.reciprocal %89 {approx = true} : vector<1x1xf32> -> vector<1x1xf32>
    %91 = vector.broadcast %90 : vector<1x1xf32> to vector<8x256xf32>
    %92 = arith.mulf %64, %91 : vector<8x256xf32>
    %93 = math.roundeven %92 : vector<8x256xf32>
    %cst_41 = arith.constant -1.280000e+02 : f32
    %cst_42 = arith.constant 1.270000e+02 : f32
    %94 = vector.broadcast %cst_41 : f32 to vector<8x256xf32>
    %95 = arith.maximumf %94, %93 : vector<8x256xf32>
    %96 = vector.broadcast %cst_42 : f32 to vector<8x256xf32>
    %97 = arith.minimumf %96, %95 : vector<8x256xf32>
    %98 = vector.broadcast %89 : vector<1x1xf32> to vector<8x256xf32>
    %99 = arith.mulf %97, %98 : vector<8x256xf32>
    %c17_i32_43 = arith.constant 17 : i32
    %100 = tpu.dynamic_rotate %99 by %c17_i32_43 dim 1 : vector<8x256xf32>, i32 -> vector<8x256xf32>
    %c16_i32_44 = arith.constant 16 : i32
    %101 = tpu.dynamic_rotate %99 by %c16_i32_44 dim 1 : vector<8x256xf32>, i32 -> vector<8x256xf32>
    %c15_i32_45 = arith.constant 15 : i32
    %102 = tpu.dynamic_rotate %99 by %c15_i32_45 dim 1 : vector<8x256xf32>, i32 -> vector<8x256xf32>
    %c1_i32_46 = arith.constant 1 : i32
    %103 = tpu.dynamic_rotate %99 by %c1_i32_46 dim 1 : vector<8x256xf32>, i32 -> vector<8x256xf32>
    %c255_i32_47 = arith.constant 255 : i32
    %104 = tpu.dynamic_rotate %99 by %c255_i32_47 dim 1 : vector<8x256xf32>, i32 -> vector<8x256xf32>
    %c241_i32_48 = arith.constant 241 : i32
    %105 = tpu.dynamic_rotate %99 by %c241_i32_48 dim 1 : vector<8x256xf32>, i32 -> vector<8x256xf32>
    %c240_i32_49 = arith.constant 240 : i32
    %106 = tpu.dynamic_rotate %99 by %c240_i32_49 dim 1 : vector<8x256xf32>, i32 -> vector<8x256xf32>
    %c239_i32_50 = arith.constant 239 : i32
    %107 = tpu.dynamic_rotate %99 by %c239_i32_50 dim 1 : vector<8x256xf32>, i32 -> vector<8x256xf32>
    %108 = tpu.concatenate %100, %101, %102, %103, %99, %104, %105, %106, %107, %1 in 0 : vector<8x256xf32>, vector<8x256xf32>, vector<8x256xf32>, vector<8x256xf32>, vector<8x256xf32>, vector<8x256xf32>, vector<8x256xf32>, vector<8x256xf32>, vector<8x256xf32>, vector<8x256xf32> -> vector<80x256xf32>
    %109 = arith.mulf %108, %0 : vector<80x256xf32>
    %110 = arith.truncf %109 : vector<80x256xf32> to vector<80x256xbf16>
    %cst_51 = arith.constant dense<0.000000e+00> : vector<4x256xf32>
    %111 = tpu.matmul %11, %110, %cst_51 {dimension_numbers = #tpu.dot_dimension_numbers<[1], [0], [0], [1], [0, 0, 1, 1], [], []>} : vector<4x80xbf16>, vector<80x256xbf16>, vector<4x256xf32> -> vector<4x256xf32>
    %c0_52 = arith.constant 0 : index
    %c0_53 = arith.constant 0 : index
    %c0_54 = arith.constant 0 : index
    %112 = vector.load %arg4[%c0_52, %c0_53, %c0_54] : memref<1x4x256xf32, #tpu.memory_space<vmem>>, vector<1x4x256xf32>
    %113 = vector.shape_cast %112 : vector<1x4x256xf32> to vector<4x256xf32>
    %114 = vector.shape_cast %111 : vector<4x256xf32> to vector<1x4x256xf32>
    tpu.vector_store %arg4[%c0_52, %c0_53, %c0_54], %114 {strides = array<i32>} : memref<1x4x256xf32, #tpu.memory_space<vmem>>, vector<1x4x256xf32>,
    return
  }
  func.func @transform_0(%arg0: i32) -> (i32, i32, i32) {
    %c0_i32 = arith.constant 0 : i32
    %c0_i32_0 = arith.constant 0 : i32
    %c0_i32_1 = arith.constant 0 : i32
    return %arg0, %c0_i32, %c0_i32_0 : i32, i32, i32
  }
  func.func @transform_1(%arg0: i32) -> (i32, i32) {
    %c0_i32 = arith.constant 0 : i32
    %c0_i32_0 = arith.constant 0 : i32
    %c0_i32_1 = arith.constant 0 : i32
    return %c0_i32, %c0_i32_0 : i32, i32
  }
  func.func @transform_2(%arg0: i32) -> (i32, i32, i32) {
    %c0_i32 = arith.constant 0 : i32
    %c0_i32_0 = arith.constant 0 : i32
    %c0_i32_1 = arith.constant 0 : i32
    %c0_i32_2 = arith.constant 0 : i32
    return %c0_i32, %c0_i32_0, %c0_i32_1 : i32, i32, i32
  }
  func.func @transform_3(%arg0: i32) -> (i32, i32, i32) {
    %c0_i32 = arith.constant 0 : i32
    %c0_i32_0 = arith.constant 0 : i32
    %c0_i32_1 = arith.constant 0 : i32
    return %arg0, %c0_i32, %c0_i32_0 : i32, i32, i32
  }
}

</mosaic_0001>

<llo_original>
// kernel: quantiseze_forward.1
$region0: #{quantiseze_forward.1}
  #allocation0 [shape = 'u32[]', space=smem, size = 0x4, offset = 0x4, fixed_abs, tag = 'smem constant byte address 0x4 - core index']
  #allocation1 [shape = 'u32[144,128]{1,0:T(1,128)}', space=vmem, size = 0x12000, scoped, tag = 'internal scratch']
  %s0 = inlined_call_operand.vmem [shape: f32[2,8,256], index: 0, kind: input, shape index: {}]
  %s1 = inlined_call_operand.vmem [shape: f32[80,256], index: 1, kind: input, shape index: {}]
  %s2 = inlined_call_operand.vmem [shape: f32[3,8,80], index: 2, kind: input, shape index: {}]
  %s3 = inlined_call_operand.vmem [shape: f32[2,4,256], index: 3, kind: output, shape index: {}]
  %s4 = sld [smem:[#allocation0]]
  $region45: #{quantiseze_forward.1} parent=0
    _
  %s6 = ssub.s32 1, %s4
  %s7 = scalar_select 0, %s6, %s4
  loop: start=0, step=1, limit=4
  $region2: #{quantiseze_forward.1} parent=0 // loop_pre_header
    _
  $region3: #{quantiseze_forward.1} parent=0 // loop_header
    %s9 = sphi 0, %s13
    %p10 = scmp.ge.s32.totalorder %s9, 4
    %s19 = sphi 0, %s21
    %s22 = sphi 0, %s19
    %s23 = sphi 0, %s22
    %s39 = sphi 0, %s23
    %s43 = sphi 0, %s43
    %s45 = sphi 0, %s43
    %s46 = sphi 0, %s45
    %s60 = sphi 0, %s46
    %s64 = sphi 0, %s64
    %s66 = sphi 0, %s64
    %s67 = sphi 0, %s66
    %s81 = sphi 0, %s67
    %s87 = sphi 0, %s89
    %s90 = sphi 0, %s87
    %s91 = sphi 0, %s90
    %s107 = sphi 0, %s91
  $region4: #{quantiseze_forward.1} parent=0 // loop_header_branch
    %12 = sbr.rel (%p10) target = $region8
  $region5: #{quantiseze_forward.1} parent=0 // loop_body
    %s14 = ssub.s32 %s9, 1
    %s15 = ssub.s32 %s9, 2
    %s16 = sadd.s32 %s9, 1
    %s17 = ssub.s32 %s9, %s16
    %p18 = scmp.eq.s32.totalorder %s17, 0
    %s20 = sadd.s32 %s19, 1
    %s21 = scalar_select %p18, %s19, %s20
    %p24 = pneg %p18
    %p25 = scmp.eq.s32.totalorder %s9, 1
    %p26 = por %p24, %p25
    %p27 = scmp.ne.s32.totalorder %s19, %s22
    %p28 = scmp.eq.s32.totalorder %s9, 0
    %p29 = por %p27, %p28
    %p30 = scmp.ne.s32.totalorder %s19, %s22
    %p31 = scmp.eq.s32.totalorder %s14, 1
    %p32 = por %p30, %p31
    %p33 = scmp.ne.s32.totalorder %s22, %s23
    %p34 = scmp.eq.s32.totalorder %s14, 0
    %p35 = por %p33, %p34
    %p36 = scmp.ne.s32.totalorder %s22, %s23
    %p37 = scmp.eq.s32.totalorder %s15, 1
    %p38 = por %p36, %p37
    %p40 = scmp.ne.s32.totalorder %s23, %s39
    %p41 = scmp.eq.s32.totalorder %s15, 0
    %p42 = por %p40, %p41
    %s44 = sadd.s32 %s43, 1
    %p47 = scmp.eq.s32.totalorder %s9, 1
    %p48 = scmp.ne.s32.totalorder %s43, %s45
    %p49 = scmp.eq.s32.totalorder %s9, 0
    %p50 = por %p48, %p49
    %p51 = scmp.ne.s32.totalorder %s43, %s45
    %p52 = scmp.eq.s32.totalorder %s14, 1
    %p53 = por %p51, %p52
    %p54 = scmp.ne.s32.totalorder %s45, %s46
    %p55 = scmp.eq.s32.totalorder %s14, 0
    %p56 = por %p54, %p55
    %p57 = scmp.ne.s32.totalorder %s45, %s46
    %p58 = scmp.eq.s32.totalorder %s15, 1
    %p59 = por %p57, %p58
    %p61 = scmp.ne.s32.totalorder %s46, %s60
    %p62 = scmp.eq.s32.totalorder %s15, 0
    %p63 = por %p61, %p62
    %s65 = sadd.s32 %s64, 1
    %p68 = scmp.eq.s32.totalorder %s9, 1
    %p69 = scmp.ne.s32.totalorder %s64, %s66
    %p70 = scmp.eq.s32.totalorder %s9, 0
    %p71 = por %p69, %p70
    %p72 = scmp.ne.s32.totalorder %s64, %s66
    %p73 = scmp.eq.s32.totalorder %s14, 1
    %p74 = por %p72, %p73
    %p75 = scmp.ne.s32.totalorder %s66, %s67
    %p76 = scmp.eq.s32.totalorder %s14, 0
    %p77 = por %p75, %p76
    %p78 = scmp.ne.s32.totalorder %s66, %s67
    %p79 = scmp.eq.s32.totalorder %s15, 1
    %p80 = por %p78, %p79
    %p82 = scmp.ne.s32.totalorder %s67, %s81
    %p83 = scmp.eq.s32.totalorder %s15, 0
    %p84 = por %p82, %p83
    %s85 = ssub.s32 %s9, %s16
    %p86 = scmp.eq.s32.totalorder %s85, 0
    %s88 = sadd.s32 %s87, 1
    %s89 = scalar_select %p86, %s87, %s88
    %p92 = pneg %p86
    %p93 = scmp.eq.s32.totalorder %s9, 1
    %p94 = por %p92, %p93
    %p95 = scmp.ne.s32.totalorder %s87, %s90
    %p96 = scmp.eq.s32.totalorder %s9, 0
    %p97 = por %p95, %p96
    %p98 = scmp.ne.s32.totalorder %s87, %s90
    %p99 = scmp.eq.s32.totalorder %s14, 1
    %p100 = por %p98, %p99
    %p101 = scmp.ne.s32.totalorder %s90, %s91
    %p102 = scmp.eq.s32.totalorder %s14, 0
    %p103 = por %p101, %p102
    %p104 = scmp.ne.s32.totalorder %s90, %s91
    %p105 = scmp.eq.s32.totalorder %s15, 1
    %p106 = por %p104, %p105
    %p108 = scmp.ne.s32.totalorder %s91, %s107
    %p109 = scmp.eq.s32.totalorder %s15, 0
    %p110 = por %p108, %p109
    %p111 = scmp.le.s32.totalorder 1, %s9
    %p112 = scmp.lt.s32.totalorder %s9, 3
    %p113 = pnand %p111, %p112
    %p114 = pneg %p113
    // Predicated region
    $region9: #{quantiseze_forward.1} parent=5 // pred_check
      _
    $region10: #{quantiseze_forward.1} parent=5 // pred_check_branch
      %116 = sbr.rel (%p113) target = $region12
    $region11: #{quantiseze_forward.1} parent=5 // pred_region
      %s117 = ssub.s32 %s9, 1
      // Predicated region
      $region13: #{quantiseze_forward.1} parent=11 // pred_check
        %p118 = pneg %p56
      $region14: #{quantiseze_forward.1} parent=11 // pred_check_branch
        %120 = sbr.rel (%p118) target = $region16
      $region15: #{quantiseze_forward.1} parent=11 // pred_region
        _
      $region16: #{quantiseze_forward.1} parent=11 // pred_fallthru
        _
      // Predicated region
      $region17: #{quantiseze_forward.1} parent=11 // pred_check
        %p121 = pneg %p77
      $region18: #{quantiseze_forward.1} parent=11 // pred_check_branch
        %123 = sbr.rel (%p121) target = $region20
      $region19: #{quantiseze_forward.1} parent=11 // pred_region
        _
      $region20: #{quantiseze_forward.1} parent=11 // pred_fallthru
        _
    $region12: #{quantiseze_forward.1} parent=5 // pred_fallthru
      _
    %p124 = scmp.lt.s32.totalorder %s9, 2
    // Predicated region
    $region21: #{quantiseze_forward.1} parent=5 // pred_check
      %p125 = pneg %p124
    $region22: #{quantiseze_forward.1} parent=5 // pred_check_branch
      %127 = sbr.rel (%p125) target = $region24
    $region23: #{quantiseze_forward.1} parent=5 // pred_region
      // Predicated region
      $region25: #{quantiseze_forward.1} parent=23 // pred_check
        %p128 = pneg %p29
      $region26: #{quantiseze_forward.1} parent=23 // pred_check_branch
        %130 = sbr.rel (%p128) target = $region28
      $region27: #{quantiseze_forward.1} parent=23 // pred_region
        %p131 = scmp.lt.s32.totalorder %s9, 1
        %s132 = scalar_select %p131, %s9, 1
        %s133 = smul.addr %s132, 2
        %s134 = smul.addr %s133, 8
        %s135 = scalar_lea.vmem %s0, %s134
      $region28: #{quantiseze_forward.1} parent=23 // pred_fallthru
        _
    $region24: #{quantiseze_forward.1} parent=5 // pred_fallthru
      _
    %p136 = scmp.le.s32.totalorder 1, %s9
    %p137 = scmp.lt.s32.totalorder %s9, 3
    %p138 = pnand %p136, %p137
    %p139 = pneg %p138
    // Predicated region
    $region29: #{quantiseze_forward.1} parent=5 // pred_check
      _
    $region30: #{quantiseze_forward.1} parent=5 // pred_check_branch
      %141 = sbr.rel (%p138) target = $region32
    $region31: #{quantiseze_forward.1} parent=5 // pred_region
      %s142 = ssub.s32 %s9, 1
      %p143 = scmp.lt.s32.totalorder %s14, 1
      %s144 = scalar_select %p143, %s14, 1
      %s145 = smul.addr %s144, 2
      %s146 = smul.addr %s145, 8
      %s147 = scalar_lea.vmem %s0, %s146
      %p148 = pneg %p35
      %p149 = pneg %p32
      %p150 = pneg %p56
      %p151 = pneg %p53
      %p152 = pneg %p77
      %p153 = pneg %p74
      %p154 = pneg %p103
      %p155 = pneg %p100
      %p156 = scmp.lt.s32.totalorder %s14, 1
      %s157 = scalar_select %p156, %s14, 1
      %s158 = smul.addr %s157, 2
      %s159 = smul.addr %s158, 4
      %s160 = scalar_lea.vmem %s3, %s159
      %p161 = scmp.lt.s32.totalorder %s14, 1
      %s162 = scalar_select %p161, %s14, 1
      %s163 = smul.addr %s162, 2
      %s164 = smul.addr %s163, 8
      %s165 = scalar_lea.vmem %s0, %s164
      %p166 = scmp.lt.s32.totalorder %s14, 1
      %s167 = scalar_select %p166, %s14, 1
      %s168 = smul.addr %s167, 2
      %s169 = smul.addr %s168, 4
      %s170 = scalar_lea.vmem %s3, %s169
      %v172 = vld [vmem:[%s1] sm:$0xff]
      %v173 = vld [vmem:[%s1 + $0x8] sm:$0xff]
      %v174 = vld [vmem:[%s1 + $0x10] sm:$0xff]
      %v175 = vld [vmem:[%s1 + $0x18] sm:$0xff]
      %v176 = vld [vmem:[%s1 + $0x20] sm:$0xff]
      %v177 = vld [vmem:[%s1 + $0x28] sm:$0xff]
      %v178 = vld [vmem:[%s1 + $0x30] sm:$0xff]
      %v179 = vld [vmem:[%s1 + $0x38] sm:$0xff]
      %v180 = vld [vmem:[%s1 + $0x40] sm:$0xff]
      %v181 = vld [vmem:[%s1 + $0x48] sm:$0xff]
      %v182 = vld [vmem:[%s1 + $0x50] sm:$0xff]
      %v183 = vld [vmem:[%s1 + $0x58] sm:$0xff]
      %v184 = vld [vmem:[%s1 + $0x60] sm:$0xff]
      %v185 = vld [vmem:[%s1 + $0x68] sm:$0xff]
      %v186 = vld [vmem:[%s1 + $0x70] sm:$0xff]
      %v187 = vld [vmem:[%s1 + $0x78] sm:$0xff]
      %v188 = vld [vmem:[%s1 + $0x80] sm:$0xff]
      %v189 = vld [vmem:[%s1 + $0x88] sm:$0xff]
      %v190 = vld [vmem:[%s1 + $0x90] sm:$0xff]
      %v191 = vld [vmem:[%s1 + $0x98] sm:$0xff]
      %v192 = vld [vmem:[%s2] sm:$0xff]
      %v193 = vpack.c.bf16 %v192, %v192
      %s194 = scalar_lea.vmem %s2, 8
      %v195 = vld [vmem:[%s194] sm:$0xff]
      %v196 = vpack.c.bf16 %v195, %v195
      %s197 = scalar_lea.vmem %s2, 16
      %v198 = vld [vmem:[%s197] sm:$0xff]
      %v199 = vpack.c.bf16 %v198, %v198
      %v200 = vld [vmem:[%s165] sm:$0xff]
      %v201 = vld [vmem:[%s165 + $0x8] sm:$0xff]
      %202 = vrot.lane.b32.xlu0 %v200, 17
      %v203 = vpop.permute.xlu0 %202
      %204 = vrot.lane.b32.xlu0 %v201, 17
      %v205 = vpop.permute.xlu0 %204
      %v206 = vlaneseq
      %v207 = vand.u32 %v206, 127
      %vm208 = vcmp.lt.s32.totalorder %v207, 17
      %v209 = vsel %vm208, %v203, %v205
      %v210 = vsel %vm208, %v205, %v203
      %211 = vrot.lane.b32.xlu0 %v200, 16
      %v212 = vpop.permute.xlu0 %211
      %213 = vrot.lane.b32.xlu0 %v201, 16
      %v214 = vpop.permute.xlu0 %213
      %vm215 = vcmp.lt.s32.totalorder %v207, 16
      %v216 = vsel %vm215, %v212, %v214
      %v217 = vsel %vm215, %v214, %v212
      %218 = vrot.lane.b32.xlu0 %v200, 15
      %v219 = vpop.permute.xlu0 %218
      %220 = vrot.lane.b32.xlu0 %v201, 15
      %v221 = vpop.permute.xlu0 %220
      %vm222 = vcmp.lt.s32.totalorder %v207, 15
      %v223 = vsel %vm222, %v219, %v221
      %v224 = vsel %vm222, %v221, %v219
      %225 = vrot.lane.b32.xlu0 %v200, 1
      %v226 = vpop.permute.xlu0 %225
      %227 = vrot.lane.b32.xlu0 %v201, 1
      %v228 = vpop.permute.xlu0 %227
      %vm229 = vcmp.lt.s32.totalorder %v207, 1
      %v230 = vsel %vm229, %v226, %v228
      %v231 = vsel %vm229, %v228, %v226
      %232 = vrot.lane.b32.xlu0 %v200, 127
      %v233 = vpop.permute.xlu0 %232
      %234 = vrot.lane.b32.xlu0 %v201, 127
      %v235 = vpop.permute.xlu0 %234
      %vm236 = vcmp.lt.s32.totalorder %v207, 127
      %v237 = vsel %vm236, %v233, %v235
      %v238 = vsel %vm236, %v235, %v233
      %239 = vrot.lane.b32.xlu0 %v200, 113
      %v240 = vpop.permute.xlu0 %239
      %241 = vrot.lane.b32.xlu0 %v201, 113
      %v242 = vpop.permute.xlu0 %241
      %vm243 = vcmp.lt.s32.totalorder %v207, 113
      %v244 = vsel %vm243, %v240, %v242
      %v245 = vsel %vm243, %v242, %v240
      %246 = vrot.lane.b32.xlu0 %v200, 112
      %v247 = vpop.permute.xlu0 %246
      %248 = vrot.lane.b32.xlu0 %v201, 112
      %v249 = vpop.permute.xlu0 %248
      %vm250 = vcmp.lt.s32.totalorder %v207, 112
      %v251 = vsel %vm250, %v247, %v249
      %v252 = vsel %vm250, %v249, %v247
      %253 = vrot.lane.b32.xlu0 %v200, 111
      %v254 = vpop.permute.xlu0 %253
      %255 = vrot.lane.b32.xlu0 %v201, 111
      %v256 = vpop.permute.xlu0 %255
      %vm257 = vcmp.lt.s32.totalorder %v207, 111
      %v258 = vsel %vm257, %v254, %v256
      %v259 = vsel %vm257, %v256, %v254
      %v260 = vmul.f32 %v210, %v172
      %v261 = vmul.f32 %v209, %v173
      %v262 = vmul.f32 %v217, %v174
      %v263 = vmul.f32 %v216, %v175
      %v264 = vmul.f32 %v224, %v176
      %v265 = vmul.f32 %v223, %v177
      %v266 = vmul.f32 %v231, %v178
      %v267 = vmul.f32 %v230, %v179
      %v268 = vmul.f32 %v200, %v180
      %v269 = vmul.f32 %v201, %v181
      %v270 = vmul.f32 %v237, %v182
      %v271 = vmul.f32 %v238, %v183
      %v272 = vmul.f32 %v244, %v184
      %v273 = vmul.f32 %v245, %v185
      %v274 = vmul.f32 %v251, %v186
      %v275 = vmul.f32 %v252, %v187
      %v276 = vmul.f32 %v258, %v188
      %v277 = vmul.f32 %v259, %v189
      %v278 = vpack.c.bf16 %v262, %v260
      %v279 = vpack.c.bf16 %v263, %v261
      %v280 = vpack.c.bf16 %v266, %v264
      %v281 = vpack.c.bf16 %v267, %v265
      %v282 = vpack.c.bf16 %v270, %v268
      %v283 = vpack.c.bf16 %v271, %v269
      %v284 = vpack.c.bf16 %v274, %v272
      %v285 = vpack.c.bf16 %v275, %v273
      %v286 = vpack.c.bf16 %v190, %v276
      %v287 = vpack.c.bf16 %v191, %v277
      %vm288 = vcmask 654336
      %v290 = vsel %vm288, %v193, 0
      %292 = vmatprep.subr.bf16.mxu0 %v279
      %293 = vmatpush1.bf16.msra.mxu0 %v278
      %294 = vmatprep.subr.bf16.mxu0 %v281
      %295 = vmatpush1.bf16.msra.mxu0 %v280
      %296 = vmatprep.subr.bf16.mxu0 %v283
      %297 = vmatpush1.bf16.msra.mxu0 %v282
      %298 = vmatprep.subr.bf16.mxu0 %v285
      %299 = vmatpush1.bf16.msra.mxu0 %v284
      %300 = vmatprep.subr.bf16.mxu0 %v287
      %301 = vmatpush1.bf16.msra.mxu0 %v286
      %302 = vmatprep.subr.bf16.mxu0 0
      %303 = vmatpush1.bf16.msra.mxu0 0
      %304 = vmatprep.subr.bf16.mxu0 0
      %305 = vmatpush1.bf16.msra.mxu0 0
      %306 = vmatprep.subr.bf16.mxu0 0
      %307 = vmatpush1.bf16.msra.mxu0 0
      %308 = vmatprep.subr.bf16.mxu0 0
      %309 = vmatpush1.bf16.msra.mxu0 0
      %310 = vmatprep.subr.bf16.mxu0 0
      %311 = vmatpush1.bf16.msra.mxu0 0
      %312 = vmatprep.subr.bf16.mxu0 0
      %313 = vmatpush1.bf16.msra.mxu0 0
      %314 = vmatprep.subr.bf16.mxu0 0
      %315 = vmatpush1.bf16.msra.mxu0 0
      %316 = vmatprep.subr.bf16.mxu0 0
      %317 = vmatpush1.bf16.msra.mxu0 0
      %318 = vmatprep.subr.bf16.mxu0 0
      %319 = vmatpush1.bf16.msra.mxu0 0
      %320 = vmatprep.subr.bf16.mxu0 0
      %321 = vmatpush1.bf16.msra.mxu0 0
      %322 = vmatprep.subr.bf16.mxu0 0
      %323 = vmatpush1.bf16.msra.mxu0 0
      %324 = vmatprep.mubr.bf16.mxu0 0
      %325 = vmatmul.mubr.bf16.gmra.mrb[0].mxu0 %v290
      %v326 = vpop.f32.mrb[0].mxu0
      %v327 = vadd.f32 0.0, %v326
      %v328 = vpop.f32.mrb[0].mxu0
      %v329 = vadd.f32 0.0, %v328
      %v330 = vpop.f32.mrb[0].mxu0
      %v331 = vpop.f32.mrb[0].mxu0
      %332 = vdwg.mxu0
      %v333 = vmin.f32 %v327, %v329
      %334 = vmin.xlane.f32.xlu0 %v333
      %v335 = vpop.xlane.xlu0 %334
      %v336 = vrot.slane %v335, 4
      %v337 = vmin.f32 %v335, %v336
      %v338 = vrot.slane %v337, 2
      %v339 = vmin.f32 %v337, %v338
      %v340 = vrot.slane %v339, 1
      %v341 = vmin.f32 %v339, %v340
      %v342 = vmax.f32 %v327, %v329
      %343 = vmax.xlane.f32.xlu0 %v342
      %v344 = vpop.xlane.xlu0 %343
      %v345 = vrot.slane %v344, 4
      %v346 = vmax.f32 %v344, %v345
      %v347 = vrot.slane %v346, 2
      %v348 = vmax.f32 %v346, %v347
      %v349 = vrot.slane %v348, 1
      %v350 = vmax.f32 %v348, %v349
      %v351 = vmax.f32 %v350, 0.0
      %v352 = vmin.f32 %v341, 0.0
      %v353 = vsub.f32 %v351, %v352
      %v354 = vmul.f32 %v353, 0.003921569
      %v355 = vmax.f32 %v354, 1.1920929e-07
      %v356 = vrcp.pop %v355
      %v357 = vmul.f32 %v327, %v356
      %v358 = vmul.f32 %v329, %v356
      %v359 = vround.ne.pseudo %v357
      %v360 = vround.ne.pseudo %v358
      %v361 = vmax.f32 %v359, -128.0
      %v362 = vmax.f32 %v360, -128.0
      %v363 = vmin.f32 %v361, 127.0
      %v364 = vmin.f32 %v362, 127.0
      %v365 = vmul.f32 %v363, %v355
      %v366 = vmul.f32 %v364, %v355
      %367 = vrot.lane.b32.xlu0 %v365, 17
      %v368 = vpop.permute.xlu0 %367
      %369 = vrot.lane.b32.xlu0 %v366, 17
      %v370 = vpop.permute.xlu0 %369
      %v371 = vsel %vm208, %v368, %v370
      %v372 = vsel %vm208, %v370, %v368
      %373 = vrot.lane.b32.xlu0 %v365, 16
      %v374 = vpop.permute.xlu0 %373
      %375 = vrot.lane.b32.xlu0 %v366, 16
      %v376 = vpop.permute.xlu0 %375
      %v377 = vsel %vm215, %v374, %v376
      %v378 = vsel %vm215, %v376, %v374
      %379 = vrot.lane.b32.xlu0 %v365, 15
      %v380 = vpop.permute.xlu0 %379
      %381 = vrot.lane.b32.xlu0 %v366, 15
      %v382 = vpop.permute.xlu0 %381
      %v383 = vsel %vm222, %v380, %v382
      %v384 = vsel %vm222, %v382, %v380
      %385 = vrot.lane.b32.xlu0 %v365, 1
      %v386 = vpop.permute.xlu0 %385
      %387 = vrot.lane.b32.xlu0 %v366, 1
      %v388 = vpop.permute.xlu0 %387
      %v389 = vsel %vm229, %v386, %v388
      %v390 = vsel %vm229, %v388, %v386
      %391 = vrot.lane.b32.xlu0 %v365, 127
      %v392 = vpop.permute.xlu0 %391
      %393 = vrot.lane.b32.xlu0 %v366, 127
      %v394 = vpop.permute.xlu0 %393
      %v395 = vsel %vm236, %v392, %v394
      %v396 = vsel %vm236, %v394, %v392
      %397 = vrot.lane.b32.xlu0 %v365, 113
      %v398 = vpop.permute.xlu0 %397
      %399 = vrot.lane.b32.xlu0 %v366, 113
      %v400 = vpop.permute.xlu0 %399
      %v401 = vsel %vm243, %v398, %v400
      %v402 = vsel %vm243, %v400, %v398
      %403 = vrot.lane.b32.xlu0 %v365, 112
      %v404 = vpop.permute.xlu0 %403
      %405 = vrot.lane.b32.xlu0 %v366, 112
      %v406 = vpop.permute.xlu0 %405
      %v407 = vsel %vm250, %v404, %v406
      %v408 = vsel %vm250, %v406, %v404
      %409 = vrot.lane.b32.xlu0 %v365, 111
      %v410 = vpop.permute.xlu0 %409
      %411 = vrot.lane.b32.xlu0 %v366, 111
      %v412 = vpop.permute.xlu0 %411
      %v413 = vsel %vm257, %v410, %v412
      %v414 = vsel %vm257, %v412, %v410
      %v415 = vmul.f32 %v372, %v172
      %v416 = vmul.f32 %v371, %v173
      %v417 = vmul.f32 %v378, %v174
      %v418 = vmul.f32 %v377, %v175
      %v419 = vmul.f32 %v384, %v176
      %v420 = vmul.f32 %v383, %v177
      %v421 = vmul.f32 %v390, %v178
      %v422 = vmul.f32 %v389, %v179
      %v423 = vmul.f32 %v365, %v180
      %v424 = vmul.f32 %v366, %v181
      %v425 = vmul.f32 %v395, %v182
      %v426 = vmul.f32 %v396, %v183
      %v427 = vmul.f32 %v401, %v184
      %v428 = vmul.f32 %v402, %v185
      %v429 = vmul.f32 %v407, %v186
      %v430 = vmul.f32 %v408, %v187
      %v431 = vmul.f32 %v413, %v188
      %v432 = vmul.f32 %v414, %v189
      %v433 = vpack.c.bf16 %v417, %v415
      %v434 = vpack.c.bf16 %v418, %v416
      %v435 = vpack.c.bf16 %v421, %v419
      %v436 = vpack.c.bf16 %v422, %v420
      %v437 = vpack.c.bf16 %v425, %v423
      %v438 = vpack.c.bf16 %v426, %v424
      %v439 = vpack.c.bf16 %v429, %v427
      %v440 = vpack.c.bf16 %v430, %v428
      %v441 = vpack.c.bf16 %v190, %v431
      %v442 = vpack.c.bf16 %v191, %v432
      %v444 = vsel %vm288, %v196, 0
      %446 = vmatprep.subr.bf16.mxu0 %v434
      %447 = vmatpush1.bf16.msra.mxu0 %v433
      %448 = vmatprep.subr.bf16.mxu0 %v436
      %449 = vmatpush1.bf16.msra.mxu0 %v435
      %450 = vmatprep.subr.bf16.mxu0 %v438
      %451 = vmatpush1.bf16.msra.mxu0 %v437
      %452 = vmatprep.subr.bf16.mxu0 %v440
      %453 = vmatpush1.bf16.msra.mxu0 %v439
      %454 = vmatprep.subr.bf16.mxu0 %v442
      %455 = vmatpush1.bf16.msra.mxu0 %v441
      %456 = vmatprep.subr.bf16.mxu0 0
      %457 = vmatpush1.bf16.msra.mxu0 0
      %458 = vmatprep.subr.bf16.mxu0 0
      %459 = vmatpush1.bf16.msra.mxu0 0
      %460 = vmatprep.subr.bf16.mxu0 0
      %461 = vmatpush1.bf16.msra.mxu0 0
      %462 = vmatprep.subr.bf16.mxu0 0
      %463 = vmatpush1.bf16.msra.mxu0 0
      %464 = vmatprep.subr.bf16.mxu0 0
      %465 = vmatpush1.bf16.msra.mxu0 0
      %466 = vmatprep.subr.bf16.mxu0 0
      %467 = vmatpush1.bf16.msra.mxu0 0
      %468 = vmatprep.subr.bf16.mxu0 0
      %469 = vmatpush1.bf16.msra.mxu0 0
      %470 = vmatprep.subr.bf16.mxu0 0
      %471 = vmatpush1.bf16.msra.mxu0 0
      %472 = vmatprep.subr.bf16.mxu0 0
      %473 = vmatpush1.bf16.msra.mxu0 0
      %474 = vmatprep.subr.bf16.mxu0 0
      %475 = vmatpush1.bf16.msra.mxu0 0
      %476 = vmatprep.subr.bf16.mxu0 0
      %477 = vmatpush1.bf16.msra.mxu0 0
      %478 = vmatprep.mubr.bf16.mxu0 0
      %479 = vmatmul.mubr.bf16.gmra.mrb[0].mxu0 %v444
      %v480 = vpop.f32.mrb[0].mxu0
      %v481 = vadd.f32 0.0, %v480
      %v482 = vpop.f32.mrb[0].mxu0
      %v483 = vadd.f32 0.0, %v482
      %v484 = vpop.f32.mrb[0].mxu0
      %v485 = vpop.f32.mrb[0].mxu0
      %486 = vdwg.mxu0
      %v487 = vmin.f32 %v481, %v483
      %488 = vmin.xlane.f32.xlu0 %v487
      %v489 = vpop.xlane.xlu0 %488
      %v490 = vrot.slane %v489, 4
      %v491 = vmin.f32 %v489, %v490
      %v492 = vrot.slane %v491, 2
      %v493 = vmin.f32 %v491, %v492
      %v494 = vrot.slane %v493, 1
      %v495 = vmin.f32 %v493, %v494
      %v496 = vmax.f32 %v481, %v483
      %497 = vmax.xlane.f32.xlu0 %v496
      %v498 = vpop.xlane.xlu0 %497
      %v499 = vrot.slane %v498, 4
      %v500 = vmax.f32 %v498, %v499
      %v501 = vrot.slane %v500, 2
      %v502 = vmax.f32 %v500, %v501
      %v503 = vrot.slane %v502, 1
      %v504 = vmax.f32 %v502, %v503
      %v505 = vsub.f32 %v495, %v341
      %v506 = vmul.f32 %v505, 0.01
      %v507 = vadd.f32 %v341, %v506
      %v508 = vsub.f32 %v504, %v350
      %v509 = vmul.f32 %v508, 0.01
      %v510 = vadd.f32 %v350, %v509
      %v511 = vmax.f32 %v510, 0.0
      %v512 = vmin.f32 %v507, 0.0
      %v513 = vsub.f32 %v511, %v512
      %v514 = vmul.f32 %v513, 0.003921569
      %v515 = vmax.f32 %v514, 1.1920929e-07
      %v516 = vrcp.pop %v515
      %v517 = vmul.f32 %v481, %v516
      %v518 = vmul.f32 %v483, %v516
      %v519 = vround.ne.pseudo %v517
      %v520 = vround.ne.pseudo %v518
      %v521 = vmax.f32 %v519, -128.0
      %v522 = vmax.f32 %v520, -128.0
      %v523 = vmin.f32 %v521, 127.0
      %v524 = vmin.f32 %v522, 127.0
      %v525 = vmul.f32 %v523, %v515
      %v526 = vmul.f32 %v524, %v515
      %527 = vrot.lane.b32.xlu0 %v525, 17
      %v528 = vpop.permute.xlu0 %527
      %529 = vrot.lane.b32.xlu0 %v526, 17
      %v530 = vpop.permute.xlu0 %529
      %v531 = vsel %vm208, %v528, %v530
      %v532 = vsel %vm208, %v530, %v528
      %533 = vrot.lane.b32.xlu0 %v525, 16
      %v534 = vpop.permute.xlu0 %533
      %535 = vrot.lane.b32.xlu0 %v526, 16
      %v536 = vpop.permute.xlu0 %535
      %v537 = vsel %vm215, %v534, %v536
      %v538 = vsel %vm215, %v536, %v534
      %539 = vrot.lane.b32.xlu0 %v525, 15
      %v540 = vpop.permute.xlu0 %539
      %541 = vrot.lane.b32.xlu0 %v526, 15
      %v542 = vpop.permute.xlu0 %541
      %v543 = vsel %vm222, %v540, %v542
      %v544 = vsel %vm222, %v542, %v540
      %545 = vrot.lane.b32.xlu0 %v525, 1
      %v546 = vpop.permute.xlu0 %545
      %547 = vrot.lane.b32.xlu0 %v526, 1
      %v548 = vpop.permute.xlu0 %547
      %v549 = vsel %vm229, %v546, %v548
      %v550 = vsel %vm229, %v548, %v546
      %551 = vrot.lane.b32.xlu0 %v525, 127
      %v552 = vpop.permute.xlu0 %551
      %553 = vrot.lane.b32.xlu0 %v526, 127
      %v554 = vpop.permute.xlu0 %553
      %v555 = vsel %vm236, %v552, %v554
      %v556 = vsel %vm236, %v554, %v552
      %557 = vrot.lane.b32.xlu0 %v525, 113
      %v558 = vpop.permute.xlu0 %557
      %559 = vrot.lane.b32.xlu0 %v526, 113
      %v560 = vpop.permute.xlu0 %559
      %v561 = vsel %vm243, %v558, %v560
      %v562 = vsel %vm243, %v560, %v558
      %563 = vrot.lane.b32.xlu0 %v525, 112
      %v564 = vpop.permute.xlu0 %563
      %565 = vrot.lane.b32.xlu0 %v526, 112
      %v566 = vpop.permute.xlu0 %565
      %v567 = vsel %vm250, %v564, %v566
      %v568 = vsel %vm250, %v566, %v564
      %569 = vrot.lane.b32.xlu0 %v525, 111
      %v570 = vpop.permute.xlu0 %569
      %571 = vrot.lane.b32.xlu0 %v526, 111
      %v572 = vpop.permute.xlu0 %571
      %v573 = vsel %vm257, %v570, %v572
      %v574 = vsel %vm257, %v572, %v570
      %v575 = vmul.f32 %v532, %v172
      %v576 = vmul.f32 %v531, %v173
      %v577 = vmul.f32 %v538, %v174
      %v578 = vmul.f32 %v537, %v175
      %v579 = vmul.f32 %v544, %v176
      %v580 = vmul.f32 %v543, %v177
      %v581 = vmul.f32 %v550, %v178
      %v582 = vmul.f32 %v549, %v179
      %v583 = vmul.f32 %v525, %v180
      %v584 = vmul.f32 %v526, %v181
      %v585 = vmul.f32 %v555, %v182
      %v586 = vmul.f32 %v556, %v183
      %v587 = vmul.f32 %v561, %v184
      %v588 = vmul.f32 %v562, %v185
      %v589 = vmul.f32 %v567, %v186
      %v590 = vmul.f32 %v568, %v187
      %v591 = vmul.f32 %v573, %v188
      %v592 = vmul.f32 %v574, %v189
      %v593 = vpack.c.bf16 %v577, %v575
      %v594 = vpack.c.bf16 %v578, %v576
      %v595 = vpack.c.bf16 %v581, %v579
      %v596 = vpack.c.bf16 %v582, %v580
      %v597 = vpack.c.bf16 %v585, %v583
      %v598 = vpack.c.bf16 %v586, %v584
      %v599 = vpack.c.bf16 %v589, %v587
      %v600 = vpack.c.bf16 %v590, %v588
      %v601 = vpack.c.bf16 %v190, %v591
      %v602 = vpack.c.bf16 %v191, %v592
      %v604 = vsel %vm288, %v199, 0
      %606 = vmatprep.subr.bf16.mxu0 %v594
      %607 = vmatpush1.bf16.msra.mxu0 %v593
      %608 = vmatprep.subr.bf16.mxu0 %v596
      %609 = vmatpush1.bf16.msra.mxu0 %v595
      %610 = vmatprep.subr.bf16.mxu0 %v598
      %611 = vmatpush1.bf16.msra.mxu0 %v597
      %612 = vmatprep.subr.bf16.mxu0 %v600
      %613 = vmatpush1.bf16.msra.mxu0 %v599
      %614 = vmatprep.subr.bf16.mxu0 %v602
      %615 = vmatpush1.bf16.msra.mxu0 %v601
      %616 = vmatprep.subr.bf16.mxu0 0
      %617 = vmatpush1.bf16.msra.mxu0 0
      %618 = vmatprep.subr.bf16.mxu0 0
      %619 = vmatpush1.bf16.msra.mxu0 0
      %620 = vmatprep.subr.bf16.mxu0 0
      %621 = vmatpush1.bf16.msra.mxu0 0
      %622 = vmatprep.subr.bf16.mxu0 0
      %623 = vmatpush1.bf16.msra.mxu0 0
      %624 = vmatprep.subr.bf16.mxu0 0
      %625 = vmatpush1.bf16.msra.mxu0 0
      %626 = vmatprep.subr.bf16.mxu0 0
      %627 = vmatpush1.bf16.msra.mxu0 0
      %628 = vmatprep.subr.bf16.mxu0 0
      %629 = vmatpush1.bf16.msra.mxu0 0
      %630 = vmatprep.subr.bf16.mxu0 0
      %631 = vmatpush1.bf16.msra.mxu0 0
      %632 = vmatprep.subr.bf16.mxu0 0
      %633 = vmatpush1.bf16.msra.mxu0 0
      %634 = vmatprep.subr.bf16.mxu0 0
      %635 = vmatpush1.bf16.msra.mxu0 0
      %636 = vmatprep.subr.bf16.mxu0 0
      %637 = vmatpush1.bf16.msra.mxu0 0
      %638 = vmatprep.mubr.bf16.mxu0 0
      %639 = vmatmul.mubr.bf16.gmra.mrb[0].mxu0 %v604
      %v640 = vpop.f32.mrb[0].mxu0
      %v641 = vadd.f32 0.0, %v640
      %v642 = vpop.f32.mrb[0].mxu0
      %v643 = vadd.f32 0.0, %v642
      %v644 = vpop.f32.mrb[0].mxu0
      %v645 = vpop.f32.mrb[0].mxu0
      %646 = vdwg.mxu0
      %v649 = vcombine.low %v641, %v643
      %651 = vst [vmem:[%s170] sm:$0xff] %v649
      %p652 = scmp.lt.s32.totalorder %s14, 1
      %s653 = scalar_select %p652, %s14, 1
      %s654 = smul.addr %s653, 2
      %s655 = smul.addr %s654, 4
      %s656 = scalar_lea.vmem %s3, %s655
      // Predicated region
      $region33: #{quantiseze_forward.1} parent=31 // pred_check
        %p657 = pneg %p100
      $region34: #{quantiseze_forward.1} parent=31 // pred_check_branch
        %659 = sbr.rel (%p657) target = $region36
      $region35: #{quantiseze_forward.1} parent=31 // pred_region
        _
      $region36: #{quantiseze_forward.1} parent=31 // pred_fallthru
        _
    $region32: #{quantiseze_forward.1} parent=5 // pred_fallthru
      _
    %p660 = scmp.le.s32.totalorder 2, %s9
    // Predicated region
    $region37: #{quantiseze_forward.1} parent=5 // pred_check
      %p661 = pneg %p660
    $region38: #{quantiseze_forward.1} parent=5 // pred_check_branch
      %663 = sbr.rel (%p661) target = $region40
    $region39: #{quantiseze_forward.1} parent=5 // pred_region
      %s664 = ssub.s32 %s9, 2
      // Predicated region
      $region41: #{quantiseze_forward.1} parent=39 // pred_check
        %p665 = pneg %p106
      $region42: #{quantiseze_forward.1} parent=39 // pred_check_branch
        %667 = sbr.rel (%p665) target = $region44
      $region43: #{quantiseze_forward.1} parent=39 // pred_region
        %p668 = scmp.lt.s32.totalorder %s15, 1
        %s669 = scalar_select %p668, %s15, 1
        %s670 = smul.addr %s669, 2
        %s671 = smul.addr %s670, 4
        %s672 = scalar_lea.vmem %s3, %s671
      $region44: #{quantiseze_forward.1} parent=39 // pred_fallthru
        _
    $region40: #{quantiseze_forward.1} parent=5 // pred_fallthru
      _
  $region6: #{quantiseze_forward.1} parent=0 // loop_footer
    %s13 = sadd.s32 1, %s9
  $region7: #{quantiseze_forward.1} parent=0 // loop_footer_branch
    %8 = sbr.rel target = $region3
  $region8: #{quantiseze_forward.1} parent=0 // loop_exit
    _

</llo_original>
